<compile_context>
chip_gen: v5e
topology: v5e:2x2
jax: 0.10.0
libtpu: 0.0.40
codegen_flags: <defaults>
</compile_context>

<pallas_src>
import functools

import jax
import jax.numpy as jnp
from jax.experimental import pallas as pl
from jax.experimental.pallas import tpu as pltpu

C = 512            # fixed by the module (BatchNorm2d(512), Linear(512, 3))
OUT = 3
EPS = 1e-5
DEFAULT_TILE_BUDGET = 4 * 1024 * 1024   # 4 MiB per x buffer (double-buffered -> 8 MiB)
MAX_BATCH_PACK = 8


# --------------------------------------------------------------------------- #
# Plan A: full-HW lane blocks, tiled over channels (and packed over batch).   #
# --------------------------------------------------------------------------- #
def _pose_kernel_ctile(x_ref, w_ref, b_ref, o_ref, acc_ref):
    # x_ref:   (B_tile, C_tile, HW)   one contiguous HBM slab
    # w_ref:   (C_tile, 3)            BN-and-mean folded Linear weight slice
    # b_ref:   (1, 3)                 BN-folded Linear bias
    # o_ref:   (B_tile, 1, 3)
    # acc_ref: (B_tile, 3) f32        running partial output across channel tiles
    ci = pl.program_id(1)

    @pl.when(ci == 0)
    def _init():
        acc_ref[...] = jnp.zeros_like(acc_ref)

    sums = jnp.sum(x_ref[...].astype(jnp.float32), axis=-1)       # (B_tile, C_tile)
    acc_ref[...] += jnp.dot(sums, w_ref[...],
                            preferred_element_type=jnp.float32)    # (B_tile, 3)

    @pl.when(ci == pl.num_programs(1) - 1)
    def _finalize():
        o_ref[...] = (acc_ref[...] + b_ref[...]).reshape(o_ref.shape)


# --------------------------------------------------------------------------- #
# Plan B (fallback for very large H*W): tile the spatial (lane) axis.         #
# --------------------------------------------------------------------------- #
def _pose_kernel_hwtile(x_ref, w_ref, b_ref, o_ref, acc_ref, *,
                        hw, hw_tile, needs_mask):
    # x_ref:   (1, C, hw_tile)   one spatial tile of one batch element
    # w_ref:   (C, 3)            folded Linear weight
    # b_ref:   (1, 3)            folded Linear bias
    # o_ref:   (1, 1, 3)
    # acc_ref: (C, 1) f32        running spatial sum for this batch element
    h = pl.program_id(1)
    last = pl.num_programs(1) - 1

    @pl.when(h == 0)
    def _init():
        acc_ref[...] = jnp.zeros_like(acc_ref)

    if needs_mask:
        # Mask only on the final (partial) tile; full tiles take the cheap path.
        @pl.when(h != last)
        def _full_tile():
            x = x_ref[0].astype(jnp.float32)                       # (C, hw_tile)
            acc_ref[...] += jnp.sum(x, axis=1, keepdims=True)

        @pl.when(h == last)
        def _partial_tile():
            x = x_ref[0].astype(jnp.float32)
            col = jax.lax.broadcasted_iota(jnp.int32, x.shape, 1)
            x = jnp.where(h * hw_tile + col < hw, x, 0.0)
            acc_ref[...] += jnp.sum(x, axis=1, keepdims=True)
    else:
        x = x_ref[0].astype(jnp.float32)
        acc_ref[...] += jnp.sum(x, axis=1, keepdims=True)

    @pl.when(h == last)
    def _finalize():
        # (C, 3) * (C, 1) -> (C, 3); sublane reduce -> (1, 3). Once per batch element.
        out = jnp.sum(w_ref[...] * acc_ref[...], axis=0, keepdims=True) + b_ref[...]
        o_ref[0] = out


# --------------------------------------------------------------------------- #
# Wrapper                                                                      #
# --------------------------------------------------------------------------- #
def _pick_hw_tile(hw, cap):
    """Largest legal HW tile <= cap (multiple of 128, or the full extent)."""
    if hw <= cap:
        return hw
    t = max(128, cap - cap % 128)
    for cand in range(t, 0, -128):          # prefer an exact divisor (no masking)
        if hw % cand == 0:
            return cand
    return t                                 # partial last tile, masked in-kernel


def _vmem_limit(tile_bytes):
    return int(min(max(2 * tile_bytes + 6 * 1024 * 1024, 16 * 1024 * 1024),
                   32 * 1024 * 1024))


def pose_detect_forward(x_nchw, gamma, beta, running_mean, running_var, w, b,
                        tile_budget_bytes=DEFAULT_TILE_BUDGET,
                        force_hw_tiling=False):
    """x_nchw: (N, 512, H, W) float32/bfloat16. Returns (N, 3) f32 (eval-mode BN)."""
    n, c, hgt, wid = x_nchw.shape
    assert c == C
    hw = hgt * wid
    x = x_nchw.reshape(n, c, hw)             # metadata-only reshape: no HBM transpose
    itemsize = x.dtype.itemsize

    # Fold BatchNorm (running stats) and the 1/(H*W) mean into the Linear layer:
    #   out = (mean_hw(x)*scale + shift) @ w.T + b
    #       = sum_hw(x) @ ((scale/HW)[:, None] * w.T) + (shift @ w.T + b)
    scale = gamma * jax.lax.rsqrt(running_var + EPS)                 # (C,)
    shift = beta - running_mean * scale                              # (C,)
    w_eff = ((scale / hw)[:, None] * w.T).astype(jnp.float32)        # (C, 3)
    b_eff = (shift @ w.T + b).astype(jnp.float32)[None, :]           # (1, 3)

    c_gran = 8 if itemsize == 4 else 16      # sublane granularity (f32 vs packed bf16)

    out_shape = jax.ShapeDtypeStruct((n, 1, OUT), jnp.float32)

    if (not force_hw_tiling) and c_gran * hw * itemsize <= tile_budget_bytes:
        # ---- Plan A: contiguous full-HW blocks, channel / batch tiled ----
        c_tile = C
        while c_tile > c_gran and c_tile * hw * itemsize > tile_budget_bytes:
            c_tile //= 2
        if c_tile == C:
            # Whole channel dim fits -> pack batch elements to amortize step overhead.
            b_tile = 1
            while (b_tile * 2 <= min(n, MAX_BATCH_PACK)
                   and n % (b_tile * 2) == 0
                   and b_tile * 2 * C * hw * itemsize <= tile_budget_bytes):
                b_tile *= 2
        else:
            b_tile = 1
        num_c_tiles = C // c_tile
        tile_bytes = b_tile * c_tile * hw * itemsize

        out = pl.pallas_call(
            _pose_kernel_ctile,
            out_shape=out_shape,
            grid=(n // b_tile, num_c_tiles),
            in_specs=[
                pl.BlockSpec((b_tile, c_tile, hw), lambda ni, ci: (ni, ci, 0)),
                pl.BlockSpec((c_tile, OUT), lambda ni, ci: (ci, 0)),
                pl.BlockSpec((1, OUT), lambda ni, ci: (0, 0)),
            ],
            out_specs=pl.BlockSpec((b_tile, 1, OUT), lambda ni, ci: (ni, 0, 0)),
            scratch_shapes=[pltpu.VMEM((b_tile, OUT), jnp.float32)],
            compiler_params=pltpu.CompilerParams(
                dimension_semantics=("parallel", "arbitrary"),
                vmem_limit_bytes=_vmem_limit(tile_bytes)),
        )(x, w_eff, b_eff)
    else:
        # ---- Plan B: spatial-axis tiling (huge H*W) ----
        hw_tile_cap = max(128, (tile_budget_bytes // (C * itemsize)) // 128 * 128)
        hw_tile = _pick_hw_tile(hw, hw_tile_cap)
        num_hw_tiles = pl.cdiv(hw, hw_tile)
        needs_mask = (hw % hw_tile) != 0
        tile_bytes = C * hw_tile * itemsize

        kernel = functools.partial(_pose_kernel_hwtile, hw=hw, hw_tile=hw_tile,
                                   needs_mask=needs_mask)
        out = pl.pallas_call(
            kernel,
            out_shape=out_shape,
            grid=(n, num_hw_tiles),
            in_specs=[
                pl.BlockSpec((1, C, hw_tile), lambda ni, hi: (ni, 0, hi)),
                pl.BlockSpec((C, OUT), lambda ni, hi: (0, 0)),
                pl.BlockSpec((1, OUT), lambda ni, hi: (0, 0)),
            ],
            out_specs=pl.BlockSpec((1, 1, OUT), lambda ni, hi: (ni, 0, 0)),
            scratch_shapes=[pltpu.VMEM((C, 1), jnp.float32)],
            compiler_params=pltpu.CompilerParams(
                dimension_semantics=("parallel", "arbitrary"),
                vmem_limit_bytes=_vmem_limit(tile_bytes)),
        )(x, w_eff, b_eff)

    return out[:, 0, :]


def pose_detect_reference(x_nchw, gamma, beta, running_mean, running_var, w, b):
    """Pure-JAX reference matching the PyTorch forward (eval-mode BN)."""
    xf = x_nchw.astype(jnp.float32)
    xn = (xf - running_mean[None, :, None, None]) / jnp.sqrt(
        running_var[None, :, None, None] + EPS)
    xn = xn * gamma[None, :, None, None] + beta[None, :, None, None]
    pooled = jnp.mean(xn, axis=(2, 3))                 # (N, C)
    return pooled @ w.T + b


if __name__ == "__main__":
    key = jax.random.PRNGKey(0)
    k_x, k_g, k_b, k_m, k_v, k_w, k_bias = jax.random.split(key, 7)

    # Deterministic, non-trivial synthetic parameters.
    gamma = 1.0 + 0.1 * jax.random.normal(k_g, (C,), dtype=jnp.float32)
    beta = 0.1 * jax.random.normal(k_b, (C,), dtype=jnp.float32)
    running_mean = 0.05 * jax.random.normal(k_m, (C,), dtype=jnp.float32)
    running_var = 1.0 + 0.1 * jax.random.uniform(k_v, (C,), dtype=jnp.float32)
    w = jax.random.normal(k_w, (OUT, C), dtype=jnp.float32) / jnp.sqrt(C)
    b = 0.01 * jax.random.normal(k_bias, (OUT,), dtype=jnp.float32)

    # Case 1: small feature map -> Plan A with batch packing (one grid step total).
    x1 = jax.random.normal(k_x, (2, C, 16, 16), dtype=jnp.float32)
    out1 = jax.block_until_ready(
        pose_detect_forward(x1, gamma, beta, running_mean, running_var, w, b))
    ref1 = pose_detect_reference(x1, gamma, beta, running_mean, running_var, w, b)
    assert out1.shape == (2, OUT)
    assert jnp.allclose(out1, ref1, atol=1e-4, rtol=1e-4), (out1, ref1)

    # Case 2: larger feature map -> Plan A, one contiguous full-HW block per element.
    x2 = jax.random.normal(k_x, (2, C, 40, 40), dtype=jnp.float32)
    out2 = jax.block_until_ready(
        pose_detect_forward(x2, gamma, beta, running_mean, running_var, w, b))
    ref2 = pose_detect_reference(x2, gamma, beta, running_mean, running_var, w, b)
    assert jnp.allclose(out2, ref2, atol=1e-4, rtol=1e-4), (out2, ref2)

    # Case 3: exercise the HW-tiled fallback (forced, with a small tile budget so the
    # spatial axis is split into multiple tiles with a masked partial last tile).
    out3 = jax.block_until_ready(
        pose_detect_forward(x2, gamma, beta, running_mean, running_var, w, b,
                            tile_budget_bytes=1 << 20, force_hw_tiling=True))
    assert jnp.allclose(out3, ref2, atol=1e-4, rtol=1e-4), (out3, ref2)

    # Case 4: bfloat16 feature map (halves HBM reads); f32 accumulation in-kernel.
    x4 = jax.random.normal(k_x, (2, C, 16, 16), dtype=jnp.float32).astype(jnp.bfloat16)
    out4 = jax.block_until_ready(
        pose_detect_forward(x4, gamma, beta, running_mean, running_var, w, b))
    ref4 = pose_detect_reference(x4, gamma, beta, running_mean, running_var, w, b)
    assert jnp.allclose(out4, ref4, atol=1e-3, rtol=1e-3), (out4, ref4)

    print("KERNEL_OK")
</pallas_src>

<mosaic_0001>
module attributes {stable_mosaic.version = 11 : i64} {
  func.func @_pose_kernel_ctile(%arg0: i32, %arg1: i32, %arg2: memref<2x512x256xf32, #tpu.memory_space<vmem>>, %arg3: memref<512x3xf32, #tpu.memory_space<vmem>>, %arg4: memref<1x3xf32, #tpu.memory_space<vmem>>, %arg5: memref<2x1x3xf32, #tpu.memory_space<vmem>>, %arg6: memref<2x3xf32, #tpu.memory_space<vmem>>) attributes {dimension_semantics = [#tpu.dimension_semantics<parallel>, #tpu.dimension_semantics<arbitrary>], iteration_bounds = array<i64: 1, 1>, scalar_prefetch = 0 : i64, scratch_operands = 1 : i64, tpu.core_type = #tpu.core_type<tc>, window_params = [{transform_indices = @transform_0, window_bounds = array<i64: 2, 512, 256>}, {transform_indices = @transform_1, window_bounds = array<i64: 512, 3>}, {pipeline_mode = #tpu.pipeline_mode<synchronous>, transform_indices = @transform_2, window_bounds = array<i64: 1, 3>}, {transform_indices = @transform_3, window_bounds = array<i64: 2, 1, 3>}]} {
    %c0_i32 = arith.constant 0 : i32
    %0 = arith.cmpi eq, %arg1, %c0_i32 : i32
    %1 = arith.extui %0 : i1 to i32
    %c0_i32_0 = arith.constant 0 : i32
    %2 = arith.cmpi ne, %1, %c0_i32_0 : i32
    scf.if %2 {
      %cst_12 = arith.constant 0.000000e+00 : f32
      %13 = vector.broadcast %cst_12 : f32 to vector<2x3xf32>
      %c0_13 = arith.constant 0 : index
      %c0_14 = arith.constant 0 : index
      %14 = vector.load %arg6[%c0_13, %c0_14] : memref<2x3xf32, #tpu.memory_space<vmem>>, vector<2x3xf32>
      tpu.vector_store %arg6[%c0_13, %c0_14], %13 {strides = array<i32>} : memref<2x3xf32, #tpu.memory_space<vmem>>, vector<2x3xf32>,
    } else {
    }
    %c0 = arith.constant 0 : index
    %c0_1 = arith.constant 0 : index
    %c0_2 = arith.constant 0 : index
    %3 = vector.load %arg2[%c0, %c0_1, %c0_2] : memref<2x512x256xf32, #tpu.memory_space<vmem>>, vector<2x512x256xf32>
    %cst = arith.constant dense<0.000000e+00> : vector<2x512xf32>
    %4 = vector.multi_reduction <add>, %3, %cst [2] : vector<2x512x256xf32> to vector<2x512xf32>
    %c0_3 = arith.constant 0 : index
    %c0_4 = arith.constant 0 : index
    %5 = vector.load %arg6[%c0_3, %c0_4] : memref<2x3xf32, #tpu.memory_space<vmem>>, vector<2x3xf32>
    %c0_5 = arith.constant 0 : index
    %c0_6 = arith.constant 0 : index
    %6 = vector.load %arg3[%c0_5, %c0_6] : memref<512x3xf32, #tpu.memory_space<vmem>>, vector<512x3xf32>
    %cst_7 = arith.constant dense<0.000000e+00> : vector<2x3xf32>
    %7 = tpu.matmul %4, %6, %cst_7 {dimension_numbers = #tpu.dot_dimension_numbers<[1], [0], [0], [1], [0, 0, 1, 1], [], []>} : vector<2x512xf32>, vector<512x3xf32>, vector<2x3xf32> -> vector<2x3xf32>
    %8 = arith.addf %5, %7 : vector<2x3xf32>
    %c0_8 = arith.constant 0 : index
    %c0_9 = arith.constant 0 : index
    %9 = vector.load %arg6[%c0_8, %c0_9] : memref<2x3xf32, #tpu.memory_space<vmem>>, vector<2x3xf32>
    tpu.vector_store %arg6[%c0_8, %c0_9], %8 {strides = array<i32>} : memref<2x3xf32, #tpu.memory_space<vmem>>, vector<2x3xf32>,
    %c0_i32_10 = arith.constant 0 : i32
    %10 = arith.cmpi eq, %arg1, %c0_i32_10 : i32
    %11 = arith.extui %10 : i1 to i32
    %c0_i32_11 = arith.constant 0 : i32
    %12 = arith.cmpi ne, %11, %c0_i32_11 : i32
    scf.if %12 {
      %c0_12 = arith.constant 0 : index
      %c0_13 = arith.constant 0 : index
      %13 = vector.load %arg6[%c0_12, %c0_13] : memref<2x3xf32, #tpu.memory_space<vmem>>, vector<2x3xf32>
      %c0_14 = arith.constant 0 : index
      %c0_15 = arith.constant 0 : index
      %14 = vector.load %arg4[%c0_14, %c0_15] : memref<1x3xf32, #tpu.memory_space<vmem>>, vector<1x3xf32>
      %15 = vector.broadcast %14 : vector<1x3xf32> to vector<2x3xf32>
      %16 = arith.addf %13, %15 : vector<2x3xf32>
      %17 = vector.shape_cast %16 : vector<2x3xf32> to vector<2x1x3xf32>
      %c0_16 = arith.constant 0 : index
      %c0_17 = arith.constant 0 : index
      %c0_18 = arith.constant 0 : index
      %18 = vector.load %arg5[%c0_16, %c0_17, %c0_18] : memref<2x1x3xf32, #tpu.memory_space<vmem>>, vector<2x1x3xf32>
      tpu.vector_store %arg5[%c0_16, %c0_17, %c0_18], %17 {strides = array<i32>} : memref<2x1x3xf32, #tpu.memory_space<vmem>>, vector<2x1x3xf32>,
    } else {
    }
    return
  }
  func.func @transform_0(%arg0: i32, %arg1: i32) -> (i32, i32, i32) {
    %c0_i32 = arith.constant 0 : i32
    %c0_i32_0 = arith.constant 0 : i32
    return %arg0, %arg1, %c0_i32 : i32, i32, i32
  }
  func.func @transform_1(%arg0: i32, %arg1: i32) -> (i32, i32) {
    %c0_i32 = arith.constant 0 : i32
    %c0_i32_0 = arith.constant 0 : i32
    return %arg1, %c0_i32 : i32, i32
  }
  func.func @transform_2(%arg0: i32, %arg1: i32) -> (i32, i32) {
    %c0_i32 = arith.constant 0 : i32
    %c0_i32_0 = arith.constant 0 : i32
    %c0_i32_1 = arith.constant 0 : i32
    return %c0_i32, %c0_i32_0 : i32, i32
  }
  func.func @transform_3(%arg0: i32, %arg1: i32) -> (i32, i32, i32) {
    %c0_i32 = arith.constant 0 : i32
    %c0_i32_0 = arith.constant 0 : i32
    %c0_i32_1 = arith.constant 0 : i32
    return %arg0, %c0_i32, %c0_i32_0 : i32, i32, i32
  }
}

</mosaic_0001>

<llo_original>
// kernel: tpu_custom_call.1
$region0: #{tpu_custom_call.1}
  #allocation0 [shape = 'u32[]', space=smem, size = 0x4, offset = 0x4, fixed_abs, tag = 'smem constant byte address 0x4 - core index']
  #allocation1 [shape = 'u32[72,128]{1,0:T(1,128)}', space=vmem, size = 0x9000, scoped, tag = 'internal scratch']
  #allocation2 [shape = 'f32[2,3]{1,0:T(2,128)}', space=vmem, size = 0x400, scoped, tag = 'scratch operand']
  %s0 = inlined_call_operand.hbm [shape: f32[2,512,256], index: 0, kind: input, shape index: {}]
  %s1 = inlined_call_operand.vmem [shape: f32[512,3], index: 1, kind: input, shape index: {}]
  %s2 = inlined_call_operand.vmem [shape: f32[1,3], index: 2, kind: input, shape index: {}]
  %s3 = inlined_call_operand.hbm [shape: f32[2,1,3], index: 3, kind: output, shape index: {}]
  %s4 = sld [smem:[#allocation0]]
  $region34: #{tpu_custom_call.1} parent=0
    _
  %s6 = ssub.s32 1, %s4
  %s7 = scalar_select 0, %s6, %s4
  $region1: #{tpu_custom_call.1} parent=0
    #allocation3 [shape = 'u8[1048576]{0}', space=vmem, size = 0x100000, scoped, tag = 'input window, operand 0, single buffered']
    #allocation4 [shape = 's32[1]{0}', space=sflag, size = 0x4, scoped, tag = 'scoped memory for tpu_custom_call.1']
    #allocation5 [shape = 's32[1]{0}', space=sflag, size = 0x4, scoped, tag = 'scoped memory for tpu_custom_call.1']
    #allocation6 [shape = 'u8[1024]{0}', space=vmem, size = 0x400, scoped, tag = 'output window, operand 0, single buffered']
    %8 = vsyncpa [#allocation4], 0
    %9 = vsyncpa [#allocation5], 0
    // Predicated region
    $region2: #{tpu_custom_call.1} parent=1 // pred_check
      _
    $region3: #{tpu_custom_call.1} parent=1 // pred_check_branch
      %11 = sbr.rel (0) target = $region5
    $region4: #{tpu_custom_call.1} parent=1 // pred_region
      %13 = vsyncadd [#allocation4], 0
      %s14 = sshll.u32 %s0, 4
      %s15 = int_to_ptr.hbm [resolvable:$true] %s14
      %s16 = sshll.u32 [#allocation3], 4
      %s17 = int_to_ptr.vmem [resolvable:$true] %s16
      %22 = dma.hbm_to_vmem [thread:$0]  %s15, 32768, %s17, [#allocation4], 256, 256, 16
    $region5: #{tpu_custom_call.1} parent=1 // pred_fallthru
      _
    // Predicated region
    $region6: #{tpu_custom_call.1} parent=1 // pred_check
      _
    $region7: #{tpu_custom_call.1} parent=1 // pred_check_branch
      %24 = sbr.rel (0) target = $region9
    $region8: #{tpu_custom_call.1} parent=1 // pred_region
      _
    $region9: #{tpu_custom_call.1} parent=1 // pred_fallthru
      _
    // Predicated region
    $region10: #{tpu_custom_call.1} parent=1 // pred_check
      _
    $region11: #{tpu_custom_call.1} parent=1 // pred_check_branch
      %26 = sbr.rel (0) target = $region13
    $region12: #{tpu_custom_call.1} parent=1 // pred_region
      _
    $region13: #{tpu_custom_call.1} parent=1 // pred_fallthru
      _
    // Predicated region
    $region14: #{tpu_custom_call.1} parent=1 // pred_check
      _
    $region15: #{tpu_custom_call.1} parent=1 // pred_check_branch
      %28 = sbr.rel (0) target = $region17
    $region16: #{tpu_custom_call.1} parent=1 // pred_region
      %30 = dma.done [#allocation4], 32768
    $region17: #{tpu_custom_call.1} parent=1 // pred_fallthru
      _
    %p31 = scmp.eq.s32.totalorder 0, 0
    // Predicated region
    $region18: #{tpu_custom_call.1} parent=1 // pred_check
      %p32 = pneg %p31
    $region19: #{tpu_custom_call.1} parent=1 // pred_check_branch
      %34 = sbr.rel (%p32) target = $region21
    $region20: #{tpu_custom_call.1} parent=1 // pred_region
      %vm35 = vcmask 17408
      %36 = vst.msk [vmem:[#allocation2] sm:$0x3] %vm35, 0.0
    $region21: #{tpu_custom_call.1} parent=1 // pred_fallthru
      _
    %v37 = vld [vmem:[#allocation3] sm:$0xff]
    %v38 = vld [vmem:[#allocation3 + $0x8] sm:$0xff]
    %v39 = vld [vmem:[#allocation3 + $0x10] sm:$0xff]
    %v40 = vld [vmem:[#allocation3 + $0x18] sm:$0xff]
    %v41 = vld [vmem:[#allocation3 + $0x20] sm:$0xff]
    %v42 = vld [vmem:[#allocation3 + $0x28] sm:$0xff]
    %v43 = vld [vmem:[#allocation3 + $0x30] sm:$0xff]
    %v44 = vld [vmem:[#allocation3 + $0x38] sm:$0xff]
    %v45 = vld [vmem:[#allocation3 + $0x40] sm:$0xff]
    %v46 = vld [vmem:[#allocation3 + $0x48] sm:$0xff]
    %v47 = vld [vmem:[#allocation3 + $0x50] sm:$0xff]
    %v48 = vld [vmem:[#allocation3 + $0x58] sm:$0xff]
    %v49 = vld [vmem:[#allocation3 + $0x60] sm:$0xff]
    %v50 = vld [vmem:[#allocation3 + $0x68] sm:$0xff]
    %v51 = vld [vmem:[#allocation3 + $0x70] sm:$0xff]
    %v52 = vld [vmem:[#allocation3 + $0x78] sm:$0xff]
    %v53 = vld [vmem:[#allocation3 + $0x80] sm:$0xff]
    %v54 = vld [vmem:[#allocation3 + $0x88] sm:$0xff]
    %v55 = vld [vmem:[#allocation3 + $0x90] sm:$0xff]
    %v56 = vld [vmem:[#allocation3 + $0x98] sm:$0xff]
    %v57 = vld [vmem:[#allocation3 + $0xa0] sm:$0xff]
    %v58 = vld [vmem:[#allocation3 + $0xa8] sm:$0xff]
    %v59 = vld [vmem:[#allocation3 + $0xb0] sm:$0xff]
    %v60 = vld [vmem:[#allocation3 + $0xb8] sm:$0xff]
    %v61 = vld [vmem:[#allocation3 + $0xc0] sm:$0xff]
    %v62 = vld [vmem:[#allocation3 + $0xc8] sm:$0xff]
    %v63 = vld [vmem:[#allocation3 + $0xd0] sm:$0xff]
    %v64 = vld [vmem:[#allocation3 + $0xd8] sm:$0xff]
    %v65 = vld [vmem:[#allocation3 + $0xe0] sm:$0xff]
    %v66 = vld [vmem:[#allocation3 + $0xe8] sm:$0xff]
    %v67 = vld [vmem:[#allocation3 + $0xf0] sm:$0xff]
    %v68 = vld [vmem:[#allocation3 + $0xf8] sm:$0xff]
    %v69 = vld [vmem:[#allocation3 + $0x100] sm:$0xff]
    %v70 = vld [vmem:[#allocation3 + $0x108] sm:$0xff]
    %v71 = vld [vmem:[#allocation3 + $0x110] sm:$0xff]
    %v72 = vld [vmem:[#allocation3 + $0x118] sm:$0xff]
    %v73 = vld [vmem:[#allocation3 + $0x120] sm:$0xff]
    %v74 = vld [vmem:[#allocation3 + $0x128] sm:$0xff]
    %v75 = vld [vmem:[#allocation3 + $0x130] sm:$0xff]
    %v76 = vld [vmem:[#allocation3 + $0x138] sm:$0xff]
    %v77 = vld [vmem:[#allocation3 + $0x140] sm:$0xff]
    %v78 = vld [vmem:[#allocation3 + $0x148] sm:$0xff]
    %v79 = vld [vmem:[#allocation3 + $0x150] sm:$0xff]
    %v80 = vld [vmem:[#allocation3 + $0x158] sm:$0xff]
    %v81 = vld [vmem:[#allocation3 + $0x160] sm:$0xff]
    %v82 = vld [vmem:[#allocation3 + $0x168] sm:$0xff]
    %v83 = vld [vmem:[#allocation3 + $0x170] sm:$0xff]
    %v84 = vld [vmem:[#allocation3 + $0x178] sm:$0xff]
    %v85 = vld [vmem:[#allocation3 + $0x180] sm:$0xff]
    %v86 = vld [vmem:[#allocation3 + $0x188] sm:$0xff]
    %v87 = vld [vmem:[#allocation3 + $0x190] sm:$0xff]
    %v88 = vld [vmem:[#allocation3 + $0x198] sm:$0xff]
    %v89 = vld [vmem:[#allocation3 + $0x1a0] sm:$0xff]
    %v90 = vld [vmem:[#allocation3 + $0x1a8] sm:$0xff]
    %v91 = vld [vmem:[#allocation3 + $0x1b0] sm:$0xff]
    %v92 = vld [vmem:[#allocation3 + $0x1b8] sm:$0xff]
    %v93 = vld [vmem:[#allocation3 + $0x1c0] sm:$0xff]
    %v94 = vld [vmem:[#allocation3 + $0x1c8] sm:$0xff]
    %v95 = vld [vmem:[#allocation3 + $0x1d0] sm:$0xff]
    %v96 = vld [vmem:[#allocation3 + $0x1d8] sm:$0xff]
    %v97 = vld [vmem:[#allocation3 + $0x1e0] sm:$0xff]
    %v98 = vld [vmem:[#allocation3 + $0x1e8] sm:$0xff]
    %v99 = vld [vmem:[#allocation3 + $0x1f0] sm:$0xff]
    %v100 = vld [vmem:[#allocation3 + $0x1f8] sm:$0xff]
    %v101 = vld [vmem:[#allocation3 + $0x200] sm:$0xff]
    %v102 = vld [vmem:[#allocation3 + $0x208] sm:$0xff]
    %v103 = vld [vmem:[#allocation3 + $0x210] sm:$0xff]
    %v104 = vld [vmem:[#allocation3 + $0x218] sm:$0xff]
    %v105 = vld [vmem:[#allocation3 + $0x220] sm:$0xff]
    %v106 = vld [vmem:[#allocation3 + $0x228] sm:$0xff]
    %v107 = vld [vmem:[#allocation3 + $0x230] sm:$0xff]
    %v108 = vld [vmem:[#allocation3 + $0x238] sm:$0xff]
    %v109 = vld [vmem:[#allocation3 + $0x240] sm:$0xff]
    %v110 = vld [vmem:[#allocation3 + $0x248] sm:$0xff]
    %v111 = vld [vmem:[#allocation3 + $0x250] sm:$0xff]
    %v112 = vld [vmem:[#allocation3 + $0x258] sm:$0xff]
    %v113 = vld [vmem:[#allocation3 + $0x260] sm:$0xff]
    %v114 = vld [vmem:[#allocation3 + $0x268] sm:$0xff]
    %v115 = vld [vmem:[#allocation3 + $0x270] sm:$0xff]
    %v116 = vld [vmem:[#allocation3 + $0x278] sm:$0xff]
    %v117 = vld [vmem:[#allocation3 + $0x280] sm:$0xff]
    %v118 = vld [vmem:[#allocation3 + $0x288] sm:$0xff]
    %v119 = vld [vmem:[#allocation3 + $0x290] sm:$0xff]
    %v120 = vld [vmem:[#allocation3 + $0x298] sm:$0xff]
    %v121 = vld [vmem:[#allocation3 + $0x2a0] sm:$0xff]
    %v122 = vld [vmem:[#allocation3 + $0x2a8] sm:$0xff]
    %v123 = vld [vmem:[#allocation3 + $0x2b0] sm:$0xff]
    %v124 = vld [vmem:[#allocation3 + $0x2b8] sm:$0xff]
    %v125 = vld [vmem:[#allocation3 + $0x2c0] sm:$0xff]
    %v126 = vld [vmem:[#allocation3 + $0x2c8] sm:$0xff]
    %v127 = vld [vmem:[#allocation3 + $0x2d0] sm:$0xff]
    %v128 = vld [vmem:[#allocation3 + $0x2d8] sm:$0xff]
    %v129 = vld [vmem:[#allocation3 + $0x2e0] sm:$0xff]
    %v130 = vld [vmem:[#allocation3 + $0x2e8] sm:$0xff]
    %v131 = vld [vmem:[#allocation3 + $0x2f0] sm:$0xff]
    %v132 = vld [vmem:[#allocation3 + $0x2f8] sm:$0xff]
    %v133 = vld [vmem:[#allocation3 + $0x300] sm:$0xff]
    %v134 = vld [vmem:[#allocation3 + $0x308] sm:$0xff]
    %v135 = vld [vmem:[#allocation3 + $0x310] sm:$0xff]
    %v136 = vld [vmem:[#allocation3 + $0x318] sm:$0xff]
    %v137 = vld [vmem:[#allocation3 + $0x320] sm:$0xff]
    %v138 = vld [vmem:[#allocation3 + $0x328] sm:$0xff]
    %v139 = vld [vmem:[#allocation3 + $0x330] sm:$0xff]
    %v140 = vld [vmem:[#allocation3 + $0x338] sm:$0xff]
    %v141 = vld [vmem:[#allocation3 + $0x340] sm:$0xff]
    %v142 = vld [vmem:[#allocation3 + $0x348] sm:$0xff]
    %v143 = vld [vmem:[#allocation3 + $0x350] sm:$0xff]
    %v144 = vld [vmem:[#allocation3 + $0x358] sm:$0xff]
    %v145 = vld [vmem:[#allocation3 + $0x360] sm:$0xff]
    %v146 = vld [vmem:[#allocation3 + $0x368] sm:$0xff]
    %v147 = vld [vmem:[#allocation3 + $0x370] sm:$0xff]
    %v148 = vld [vmem:[#allocation3 + $0x378] sm:$0xff]
    %v149 = vld [vmem:[#allocation3 + $0x380] sm:$0xff]
    %v150 = vld [vmem:[#allocation3 + $0x388] sm:$0xff]
    %v151 = vld [vmem:[#allocation3 + $0x390] sm:$0xff]
    %v152 = vld [vmem:[#allocation3 + $0x398] sm:$0xff]
    %v153 = vld [vmem:[#allocation3 + $0x3a0] sm:$0xff]
    %v154 = vld [vmem:[#allocation3 + $0x3a8] sm:$0xff]
    %v155 = vld [vmem:[#allocation3 + $0x3b0] sm:$0xff]
    %v156 = vld [vmem:[#allocation3 + $0x3b8] sm:$0xff]
    %v157 = vld [vmem:[#allocation3 + $0x3c0] sm:$0xff]
    %v158 = vld [vmem:[#allocation3 + $0x3c8] sm:$0xff]
    %v159 = vld [vmem:[#allocation3 + $0x3d0] sm:$0xff]
    %v160 = vld [vmem:[#allocation3 + $0x3d8] sm:$0xff]
    %v161 = vld [vmem:[#allocation3 + $0x3e0] sm:$0xff]
    %v162 = vld [vmem:[#allocation3 + $0x3e8] sm:$0xff]
    %v163 = vld [vmem:[#allocation3 + $0x3f0] sm:$0xff]
    %v164 = vld [vmem:[#allocation3 + $0x3f8] sm:$0xff]
    %v165 = vld [vmem:[#allocation3 + $0x400] sm:$0xff]
    %v166 = vld [vmem:[#allocation3 + $0x408] sm:$0xff]
    %v167 = vld [vmem:[#allocation3 + $0x410] sm:$0xff]
    %v168 = vld [vmem:[#allocation3 + $0x418] sm:$0xff]
    %v169 = vld [vmem:[#allocation3 + $0x420] sm:$0xff]
    %v170 = vld [vmem:[#allocation3 + $0x428] sm:$0xff]
    %v171 = vld [vmem:[#allocation3 + $0x430] sm:$0xff]
    %v172 = vld [vmem:[#allocation3 + $0x438] sm:$0xff]
    %v173 = vld [vmem:[#allocation3 + $0x440] sm:$0xff]
    %v174 = vld [vmem:[#allocation3 + $0x448] sm:$0xff]
    %v175 = vld [vmem:[#allocation3 + $0x450] sm:$0xff]
    %v176 = vld [vmem:[#allocation3 + $0x458] sm:$0xff]
    %v177 = vld [vmem:[#allocation3 + $0x460] sm:$0xff]
    %v178 = vld [vmem:[#allocation3 + $0x468] sm:$0xff]
    %v179 = vld [vmem:[#allocation3 + $0x470] sm:$0xff]
    %v180 = vld [vmem:[#allocation3 + $0x478] sm:$0xff]
    %v181 = vld [vmem:[#allocation3 + $0x480] sm:$0xff]
    %v182 = vld [vmem:[#allocation3 + $0x488] sm:$0xff]
    %v183 = vld [vmem:[#allocation3 + $0x490] sm:$0xff]
    %v184 = vld [vmem:[#allocation3 + $0x498] sm:$0xff]
    %v185 = vld [vmem:[#allocation3 + $0x4a0] sm:$0xff]
    %v186 = vld [vmem:[#allocation3 + $0x4a8] sm:$0xff]
    %v187 = vld [vmem:[#allocation3 + $0x4b0] sm:$0xff]
    %v188 = vld [vmem:[#allocation3 + $0x4b8] sm:$0xff]
    %v189 = vld [vmem:[#allocation3 + $0x4c0] sm:$0xff]
    %v190 = vld [vmem:[#allocation3 + $0x4c8] sm:$0xff]
    %v191 = vld [vmem:[#allocation3 + $0x4d0] sm:$0xff]
    %v192 = vld [vmem:[#allocation3 + $0x4d8] sm:$0xff]
    %v193 = vld [vmem:[#allocation3 + $0x4e0] sm:$0xff]
    %v194 = vld [vmem:[#allocation3 + $0x4e8] sm:$0xff]
    %v195 = vld [vmem:[#allocation3 + $0x4f0] sm:$0xff]
    %v196 = vld [vmem:[#allocation3 + $0x4f8] sm:$0xff]
    %v197 = vld [vmem:[#allocation3 + $0x500] sm:$0xff]
    %v198 = vld [vmem:[#allocation3 + $0x508] sm:$0xff]
    %v199 = vld [vmem:[#allocation3 + $0x510] sm:$0xff]
    %v200 = vld [vmem:[#allocation3 + $0x518] sm:$0xff]
    %v201 = vld [vmem:[#allocation3 + $0x520] sm:$0xff]
    %v202 = vld [vmem:[#allocation3 + $0x528] sm:$0xff]
    %v203 = vld [vmem:[#allocation3 + $0x530] sm:$0xff]
    %v204 = vld [vmem:[#allocation3 + $0x538] sm:$0xff]
    %v205 = vld [vmem:[#allocation3 + $0x540] sm:$0xff]
    %v206 = vld [vmem:[#allocation3 + $0x548] sm:$0xff]
    %v207 = vld [vmem:[#allocation3 + $0x550] sm:$0xff]
    %v208 = vld [vmem:[#allocation3 + $0x558] sm:$0xff]
    %v209 = vld [vmem:[#allocation3 + $0x560] sm:$0xff]
    %v210 = vld [vmem:[#allocation3 + $0x568] sm:$0xff]
    %v211 = vld [vmem:[#allocation3 + $0x570] sm:$0xff]
    %v212 = vld [vmem:[#allocation3 + $0x578] sm:$0xff]
    %v213 = vld [vmem:[#allocation3 + $0x580] sm:$0xff]
    %v214 = vld [vmem:[#allocation3 + $0x588] sm:$0xff]
    %v215 = vld [vmem:[#allocation3 + $0x590] sm:$0xff]
    %v216 = vld [vmem:[#allocation3 + $0x598] sm:$0xff]
    %v217 = vld [vmem:[#allocation3 + $0x5a0] sm:$0xff]
    %v218 = vld [vmem:[#allocation3 + $0x5a8] sm:$0xff]
    %v219 = vld [vmem:[#allocation3 + $0x5b0] sm:$0xff]
    %v220 = vld [vmem:[#allocation3 + $0x5b8] sm:$0xff]
    %v221 = vld [vmem:[#allocation3 + $0x5c0] sm:$0xff]
    %v222 = vld [vmem:[#allocation3 + $0x5c8] sm:$0xff]
    %v223 = vld [vmem:[#allocation3 + $0x5d0] sm:$0xff]
    %v224 = vld [vmem:[#allocation3 + $0x5d8] sm:$0xff]
    %v225 = vld [vmem:[#allocation3 + $0x5e0] sm:$0xff]
    %v226 = vld [vmem:[#allocation3 + $0x5e8] sm:$0xff]
    %v227 = vld [vmem:[#allocation3 + $0x5f0] sm:$0xff]
    %v228 = vld [vmem:[#allocation3 + $0x5f8] sm:$0xff]
    %v229 = vld [vmem:[#allocation3 + $0x600] sm:$0xff]
    %v230 = vld [vmem:[#allocation3 + $0x608] sm:$0xff]
    %v231 = vld [vmem:[#allocation3 + $0x610] sm:$0xff]
    %v232 = vld [vmem:[#allocation3 + $0x618] sm:$0xff]
    %v233 = vld [vmem:[#allocation3 + $0x620] sm:$0xff]
    %v234 = vld [vmem:[#allocation3 + $0x628] sm:$0xff]
    %v235 = vld [vmem:[#allocation3 + $0x630] sm:$0xff]
    %v236 = vld [vmem:[#allocation3 + $0x638] sm:$0xff]
    %v237 = vld [vmem:[#allocation3 + $0x640] sm:$0xff]
    %v238 = vld [vmem:[#allocation3 + $0x648] sm:$0xff]
    %v239 = vld [vmem:[#allocation3 + $0x650] sm:$0xff]
    %v240 = vld [vmem:[#allocation3 + $0x658] sm:$0xff]
    %v241 = vld [vmem:[#allocation3 + $0x660] sm:$0xff]
    %v242 = vld [vmem:[#allocation3 + $0x668] sm:$0xff]
    %v243 = vld [vmem:[#allocation3 + $0x670] sm:$0xff]
    %v244 = vld [vmem:[#allocation3 + $0x678] sm:$0xff]
    %v245 = vld [vmem:[#allocation3 + $0x680] sm:$0xff]
    %v246 = vld [vmem:[#allocation3 + $0x688] sm:$0xff]
    %v247 = vld [vmem:[#allocation3 + $0x690] sm:$0xff]
    %v248 = vld [vmem:[#allocation3 + $0x698] sm:$0xff]
    %v249 = vld [vmem:[#allocation3 + $0x6a0] sm:$0xff]
    %v250 = vld [vmem:[#allocation3 + $0x6a8] sm:$0xff]
    %v251 = vld [vmem:[#allocation3 + $0x6b0] sm:$0xff]
    %v252 = vld [vmem:[#allocation3 + $0x6b8] sm:$0xff]
    %v253 = vld [vmem:[#allocation3 + $0x6c0] sm:$0xff]
    %v254 = vld [vmem:[#allocation3 + $0x6c8] sm:$0xff]
    %v255 = vld [vmem:[#allocation3 + $0x6d0] sm:$0xff]
    %v256 = vld [vmem:[#allocation3 + $0x6d8] sm:$0xff]
    %v257 = vld [vmem:[#allocation3 + $0x6e0] sm:$0xff]
    %v258 = vld [vmem:[#allocation3 + $0x6e8] sm:$0xff]
    %v259 = vld [vmem:[#allocation3 + $0x6f0] sm:$0xff]
    %v260 = vld [vmem:[#allocation3 + $0x6f8] sm:$0xff]
    %v261 = vld [vmem:[#allocation3 + $0x700] sm:$0xff]
    %v262 = vld [vmem:[#allocation3 + $0x708] sm:$0xff]
    %v263 = vld [vmem:[#allocation3 + $0x710] sm:$0xff]
    %v264 = vld [vmem:[#allocation3 + $0x718] sm:$0xff]
    %v265 = vld [vmem:[#allocation3 + $0x720] sm:$0xff]
    %v266 = vld [vmem:[#allocation3 + $0x728] sm:$0xff]
    %v267 = vld [vmem:[#allocation3 + $0x730] sm:$0xff]
    %v268 = vld [vmem:[#allocation3 + $0x738] sm:$0xff]
    %v269 = vld [vmem:[#allocation3 + $0x740] sm:$0xff]
    %v270 = vld [vmem:[#allocation3 + $0x748] sm:$0xff]
    %v271 = vld [vmem:[#allocation3 + $0x750] sm:$0xff]
    %v272 = vld [vmem:[#allocation3 + $0x758] sm:$0xff]
    %v273 = vld [vmem:[#allocation3 + $0x760] sm:$0xff]
    %v274 = vld [vmem:[#allocation3 + $0x768] sm:$0xff]
    %v275 = vld [vmem:[#allocation3 + $0x770] sm:$0xff]
    %v276 = vld [vmem:[#allocation3 + $0x778] sm:$0xff]
    %v277 = vld [vmem:[#allocation3 + $0x780] sm:$0xff]
    %v278 = vld [vmem:[#allocation3 + $0x788] sm:$0xff]
    %v279 = vld [vmem:[#allocation3 + $0x790] sm:$0xff]
    %v280 = vld [vmem:[#allocation3 + $0x798] sm:$0xff]
    %v281 = vld [vmem:[#allocation3 + $0x7a0] sm:$0xff]
    %v282 = vld [vmem:[#allocation3 + $0x7a8] sm:$0xff]
    %v283 = vld [vmem:[#allocation3 + $0x7b0] sm:$0xff]
    %v284 = vld [vmem:[#allocation3 + $0x7b8] sm:$0xff]
    %v285 = vld [vmem:[#allocation3 + $0x7c0] sm:$0xff]
    %v286 = vld [vmem:[#allocation3 + $0x7c8] sm:$0xff]
    %v287 = vld [vmem:[#allocation3 + $0x7d0] sm:$0xff]
    %v288 = vld [vmem:[#allocation3 + $0x7d8] sm:$0xff]
    %v289 = vld [vmem:[#allocation3 + $0x7e0] sm:$0xff]
    %v290 = vld [vmem:[#allocation3 + $0x7e8] sm:$0xff]
    %v291 = vld [vmem:[#allocation3 + $0x7f0] sm:$0xff]
    %v292 = vld [vmem:[#allocation3 + $0x7f8] sm:$0xff]
    %v293 = vadd.f32 %v37, %v38
    %294 = vadd.xlane.f32.xlu0 %v293
    %v295 = vpop.xlane.xlu0 %294
    %v296 = vadd.f32 %v39, %v40
    %297 = vadd.xlane.f32.xlu0 %v296
    %v298 = vpop.xlane.xlu0 %297
    %v299 = vadd.f32 %v41, %v42
    %300 = vadd.xlane.f32.xlu0 %v299
    %v301 = vpop.xlane.xlu0 %300
    %v302 = vadd.f32 %v43, %v44
    %303 = vadd.xlane.f32.xlu0 %v302
    %v304 = vpop.xlane.xlu0 %303
    %v305 = vadd.f32 %v45, %v46
    %306 = vadd.xlane.f32.xlu0 %v305
    %v307 = vpop.xlane.xlu0 %306
    %v308 = vadd.f32 %v47, %v48
    %309 = vadd.xlane.f32.xlu0 %v308
    %v310 = vpop.xlane.xlu0 %309
    %v311 = vadd.f32 %v49, %v50
    %312 = vadd.xlane.f32.xlu0 %v311
    %v313 = vpop.xlane.xlu0 %312
    %v314 = vadd.f32 %v51, %v52
    %315 = vadd.xlane.f32.xlu0 %v314
    %v316 = vpop.xlane.xlu0 %315
    %v317 = vadd.f32 %v53, %v54
    %318 = vadd.xlane.f32.xlu0 %v317
    %v319 = vpop.xlane.xlu0 %318
    %v320 = vadd.f32 %v55, %v56
    %321 = vadd.xlane.f32.xlu0 %v320
    %v322 = vpop.xlane.xlu0 %321
    %v323 = vadd.f32 %v57, %v58
    %324 = vadd.xlane.f32.xlu0 %v323
    %v325 = vpop.xlane.xlu0 %324
    %v326 = vadd.f32 %v59, %v60
    %327 = vadd.xlane.f32.xlu0 %v326
    %v328 = vpop.xlane.xlu0 %327
    %v329 = vadd.f32 %v61, %v62
    %330 = vadd.xlane.f32.xlu0 %v329
    %v331 = vpop.xlane.xlu0 %330
    %v332 = vadd.f32 %v63, %v64
    %333 = vadd.xlane.f32.xlu0 %v332
    %v334 = vpop.xlane.xlu0 %333
    %v335 = vadd.f32 %v65, %v66
    %336 = vadd.xlane.f32.xlu0 %v335
    %v337 = vpop.xlane.xlu0 %336
    %v338 = vadd.f32 %v67, %v68
    %339 = vadd.xlane.f32.xlu0 %v338
    %v340 = vpop.xlane.xlu0 %339
    %v341 = vadd.f32 %v69, %v70
    %342 = vadd.xlane.f32.xlu0 %v341
    %v343 = vpop.xlane.xlu0 %342
    %v344 = vadd.f32 %v71, %v72
    %345 = vadd.xlane.f32.xlu0 %v344
    %v346 = vpop.xlane.xlu0 %345
    %v347 = vadd.f32 %v73, %v74
    %348 = vadd.xlane.f32.xlu0 %v347
    %v349 = vpop.xlane.xlu0 %348
    %v350 = vadd.f32 %v75, %v76
    %351 = vadd.xlane.f32.xlu0 %v350
    %v352 = vpop.xlane.xlu0 %351
    %v353 = vadd.f32 %v77, %v78
    %354 = vadd.xlane.f32.xlu0 %v353
    %v355 = vpop.xlane.xlu0 %354
    %v356 = vadd.f32 %v79, %v80
    %357 = vadd.xlane.f32.xlu0 %v356
    %v358 = vpop.xlane.xlu0 %357
    %v359 = vadd.f32 %v81, %v82
    %360 = vadd.xlane.f32.xlu0 %v359
    %v361 = vpop.xlane.xlu0 %360
    %v362 = vadd.f32 %v83, %v84
    %363 = vadd.xlane.f32.xlu0 %v362
    %v364 = vpop.xlane.xlu0 %363
    %v365 = vadd.f32 %v85, %v86
    %366 = vadd.xlane.f32.xlu0 %v365
    %v367 = vpop.xlane.xlu0 %366
    %v368 = vadd.f32 %v87, %v88
    %369 = vadd.xlane.f32.xlu0 %v368
    %v370 = vpop.xlane.xlu0 %369
    %v371 = vadd.f32 %v89, %v90
    %372 = vadd.xlane.f32.xlu0 %v371
    %v373 = vpop.xlane.xlu0 %372
    %v374 = vadd.f32 %v91, %v92
    %375 = vadd.xlane.f32.xlu0 %v374
    %v376 = vpop.xlane.xlu0 %375
    %v377 = vadd.f32 %v93, %v94
    %378 = vadd.xlane.f32.xlu0 %v377
    %v379 = vpop.xlane.xlu0 %378
    %v380 = vadd.f32 %v95, %v96
    %381 = vadd.xlane.f32.xlu0 %v380
    %v382 = vpop.xlane.xlu0 %381
    %v383 = vadd.f32 %v97, %v98
    %384 = vadd.xlane.f32.xlu0 %v383
    %v385 = vpop.xlane.xlu0 %384
    %v386 = vadd.f32 %v99, %v100
    %387 = vadd.xlane.f32.xlu0 %v386
    %v388 = vpop.xlane.xlu0 %387
    %v389 = vadd.f32 %v101, %v102
    %390 = vadd.xlane.f32.xlu0 %v389
    %v391 = vpop.xlane.xlu0 %390
    %v392 = vadd.f32 %v103, %v104
    %393 = vadd.xlane.f32.xlu0 %v392
    %v394 = vpop.xlane.xlu0 %393
    %v395 = vadd.f32 %v105, %v106
    %396 = vadd.xlane.f32.xlu0 %v395
    %v397 = vpop.xlane.xlu0 %396
    %v398 = vadd.f32 %v107, %v108
    %399 = vadd.xlane.f32.xlu0 %v398
    %v400 = vpop.xlane.xlu0 %399
    %v401 = vadd.f32 %v109, %v110
    %402 = vadd.xlane.f32.xlu0 %v401
    %v403 = vpop.xlane.xlu0 %402
    %v404 = vadd.f32 %v111, %v112
    %405 = vadd.xlane.f32.xlu0 %v404
    %v406 = vpop.xlane.xlu0 %405
    %v407 = vadd.f32 %v113, %v114
    %408 = vadd.xlane.f32.xlu0 %v407
    %v409 = vpop.xlane.xlu0 %408
    %v410 = vadd.f32 %v115, %v116
    %411 = vadd.xlane.f32.xlu0 %v410
    %v412 = vpop.xlane.xlu0 %411
    %v413 = vadd.f32 %v117, %v118
    %414 = vadd.xlane.f32.xlu0 %v413
    %v415 = vpop.xlane.xlu0 %414
    %v416 = vadd.f32 %v119, %v120
    %417 = vadd.xlane.f32.xlu0 %v416
    %v418 = vpop.xlane.xlu0 %417
    %v419 = vadd.f32 %v121, %v122
    %420 = vadd.xlane.f32.xlu0 %v419
    %v421 = vpop.xlane.xlu0 %420
    %v422 = vadd.f32 %v123, %v124
    %423 = vadd.xlane.f32.xlu0 %v422
    %v424 = vpop.xlane.xlu0 %423
    %v425 = vadd.f32 %v125, %v126
    %426 = vadd.xlane.f32.xlu0 %v425
    %v427 = vpop.xlane.xlu0 %426
    %v428 = vadd.f32 %v127, %v128
    %429 = vadd.xlane.f32.xlu0 %v428
    %v430 = vpop.xlane.xlu0 %429
    %v431 = vadd.f32 %v129, %v130
    %432 = vadd.xlane.f32.xlu0 %v431
    %v433 = vpop.xlane.xlu0 %432
    %v434 = vadd.f32 %v131, %v132
    %435 = vadd.xlane.f32.xlu0 %v434
    %v436 = vpop.xlane.xlu0 %435
    %v437 = vadd.f32 %v133, %v134
    %438 = vadd.xlane.f32.xlu0 %v437
    %v439 = vpop.xlane.xlu0 %438
    %v440 = vadd.f32 %v135, %v136
    %441 = vadd.xlane.f32.xlu0 %v440
    %v442 = vpop.xlane.xlu0 %441
    %v443 = vadd.f32 %v137, %v138
    %444 = vadd.xlane.f32.xlu0 %v443
    %v445 = vpop.xlane.xlu0 %444
    %v446 = vadd.f32 %v139, %v140
    %447 = vadd.xlane.f32.xlu0 %v446
    %v448 = vpop.xlane.xlu0 %447
    %v449 = vadd.f32 %v141, %v142
    %450 = vadd.xlane.f32.xlu0 %v449
    %v451 = vpop.xlane.xlu0 %450
    %v452 = vadd.f32 %v143, %v144
    %453 = vadd.xlane.f32.xlu0 %v452
    %v454 = vpop.xlane.xlu0 %453
    %v455 = vadd.f32 %v145, %v146
    %456 = vadd.xlane.f32.xlu0 %v455
    %v457 = vpop.xlane.xlu0 %456
    %v458 = vadd.f32 %v147, %v148
    %459 = vadd.xlane.f32.xlu0 %v458
    %v460 = vpop.xlane.xlu0 %459
    %v461 = vadd.f32 %v149, %v150
    %462 = vadd.xlane.f32.xlu0 %v461
    %v463 = vpop.xlane.xlu0 %462
    %v464 = vadd.f32 %v151, %v152
    %465 = vadd.xlane.f32.xlu0 %v464
    %v466 = vpop.xlane.xlu0 %465
    %v467 = vadd.f32 %v153, %v154
    %468 = vadd.xlane.f32.xlu0 %v467
    %v469 = vpop.xlane.xlu0 %468
    %v470 = vadd.f32 %v155, %v156
    %471 = vadd.xlane.f32.xlu0 %v470
    %v472 = vpop.xlane.xlu0 %471
    %v473 = vadd.f32 %v157, %v158
    %474 = vadd.xlane.f32.xlu0 %v473
    %v475 = vpop.xlane.xlu0 %474
    %v476 = vadd.f32 %v159, %v160
    %477 = vadd.xlane.f32.xlu0 %v476
    %v478 = vpop.xlane.xlu0 %477
    %v479 = vadd.f32 %v161, %v162
    %480 = vadd.xlane.f32.xlu0 %v479
    %v481 = vpop.xlane.xlu0 %480
    %v482 = vadd.f32 %v163, %v164
    %483 = vadd.xlane.f32.xlu0 %v482
    %v484 = vpop.xlane.xlu0 %483
    %v485 = vadd.f32 %v165, %v166
    %486 = vadd.xlane.f32.xlu0 %v485
    %v487 = vpop.xlane.xlu0 %486
    %v488 = vadd.f32 %v167, %v168
    %489 = vadd.xlane.f32.xlu0 %v488
    %v490 = vpop.xlane.xlu0 %489
    %v491 = vadd.f32 %v169, %v170
    %492 = vadd.xlane.f32.xlu0 %v491
    %v493 = vpop.xlane.xlu0 %492
    %v494 = vadd.f32 %v171, %v172
    %495 = vadd.xlane.f32.xlu0 %v494
    %v496 = vpop.xlane.xlu0 %495
    %v497 = vadd.f32 %v173, %v174
    %498 = vadd.xlane.f32.xlu0 %v497
    %v499 = vpop.xlane.xlu0 %498
    %v500 = vadd.f32 %v175, %v176
    %501 = vadd.xlane.f32.xlu0 %v500
    %v502 = vpop.xlane.xlu0 %501
    %v503 = vadd.f32 %v177, %v178
    %504 = vadd.xlane.f32.xlu0 %v503
    %v505 = vpop.xlane.xlu0 %504
    %v506 = vadd.f32 %v179, %v180
    %507 = vadd.xlane.f32.xlu0 %v506
    %v508 = vpop.xlane.xlu0 %507
    %v509 = vadd.f32 %v181, %v182
    %510 = vadd.xlane.f32.xlu0 %v509
    %v511 = vpop.xlane.xlu0 %510
    %v512 = vadd.f32 %v183, %v184
    %513 = vadd.xlane.f32.xlu0 %v512
    %v514 = vpop.xlane.xlu0 %513
    %v515 = vadd.f32 %v185, %v186
    %516 = vadd.xlane.f32.xlu0 %v515
    %v517 = vpop.xlane.xlu0 %516
    %v518 = vadd.f32 %v187, %v188
    %519 = vadd.xlane.f32.xlu0 %v518
    %v520 = vpop.xlane.xlu0 %519
    %v521 = vadd.f32 %v189, %v190
    %522 = vadd.xlane.f32.xlu0 %v521
    %v523 = vpop.xlane.xlu0 %522
    %v524 = vadd.f32 %v191, %v192
    %525 = vadd.xlane.f32.xlu0 %v524
    %v526 = vpop.xlane.xlu0 %525
    %v527 = vadd.f32 %v193, %v194
    %528 = vadd.xlane.f32.xlu0 %v527
    %v529 = vpop.xlane.xlu0 %528
    %v530 = vadd.f32 %v195, %v196
    %531 = vadd.xlane.f32.xlu0 %v530
    %v532 = vpop.xlane.xlu0 %531
    %v533 = vadd.f32 %v197, %v198
    %534 = vadd.xlane.f32.xlu0 %v533
    %v535 = vpop.xlane.xlu0 %534
    %v536 = vadd.f32 %v199, %v200
    %537 = vadd.xlane.f32.xlu0 %v536
    %v538 = vpop.xlane.xlu0 %537
    %v539 = vadd.f32 %v201, %v202
    %540 = vadd.xlane.f32.xlu0 %v539
    %v541 = vpop.xlane.xlu0 %540
    %v542 = vadd.f32 %v203, %v204
    %543 = vadd.xlane.f32.xlu0 %v542
    %v544 = vpop.xlane.xlu0 %543
    %v545 = vadd.f32 %v205, %v206
    %546 = vadd.xlane.f32.xlu0 %v545
    %v547 = vpop.xlane.xlu0 %546
    %v548 = vadd.f32 %v207, %v208
    %549 = vadd.xlane.f32.xlu0 %v548
    %v550 = vpop.xlane.xlu0 %549
    %v551 = vadd.f32 %v209, %v210
    %552 = vadd.xlane.f32.xlu0 %v551
    %v553 = vpop.xlane.xlu0 %552
    %v554 = vadd.f32 %v211, %v212
    %555 = vadd.xlane.f32.xlu0 %v554
    %v556 = vpop.xlane.xlu0 %555
    %v557 = vadd.f32 %v213, %v214
    %558 = vadd.xlane.f32.xlu0 %v557
    %v559 = vpop.xlane.xlu0 %558
    %v560 = vadd.f32 %v215, %v216
    %561 = vadd.xlane.f32.xlu0 %v560
    %v562 = vpop.xlane.xlu0 %561
    %v563 = vadd.f32 %v217, %v218
    %564 = vadd.xlane.f32.xlu0 %v563
    %v565 = vpop.xlane.xlu0 %564
    %v566 = vadd.f32 %v219, %v220
    %567 = vadd.xlane.f32.xlu0 %v566
    %v568 = vpop.xlane.xlu0 %567
    %v569 = vadd.f32 %v221, %v222
    %570 = vadd.xlane.f32.xlu0 %v569
    %v571 = vpop.xlane.xlu0 %570
    %v572 = vadd.f32 %v223, %v224
    %573 = vadd.xlane.f32.xlu0 %v572
    %v574 = vpop.xlane.xlu0 %573
    %v575 = vadd.f32 %v225, %v226
    %576 = vadd.xlane.f32.xlu0 %v575
    %v577 = vpop.xlane.xlu0 %576
    %v578 = vadd.f32 %v227, %v228
    %579 = vadd.xlane.f32.xlu0 %v578
    %v580 = vpop.xlane.xlu0 %579
    %v581 = vadd.f32 %v229, %v230
    %582 = vadd.xlane.f32.xlu0 %v581
    %v583 = vpop.xlane.xlu0 %582
    %v584 = vadd.f32 %v231, %v232
    %585 = vadd.xlane.f32.xlu0 %v584
    %v586 = vpop.xlane.xlu0 %585
    %v587 = vadd.f32 %v233, %v234
    %588 = vadd.xlane.f32.xlu0 %v587
    %v589 = vpop.xlane.xlu0 %588
    %v590 = vadd.f32 %v235, %v236
    %591 = vadd.xlane.f32.xlu0 %v590
    %v592 = vpop.xlane.xlu0 %591
    %v593 = vadd.f32 %v237, %v238
    %594 = vadd.xlane.f32.xlu0 %v593
    %v595 = vpop.xlane.xlu0 %594
    %v596 = vadd.f32 %v239, %v240
    %597 = vadd.xlane.f32.xlu0 %v596
    %v598 = vpop.xlane.xlu0 %597
    %v599 = vadd.f32 %v241, %v242
    %600 = vadd.xlane.f32.xlu0 %v599
    %v601 = vpop.xlane.xlu0 %600
    %v602 = vadd.f32 %v243, %v244
    %603 = vadd.xlane.f32.xlu0 %v602
    %v604 = vpop.xlane.xlu0 %603
    %v605 = vadd.f32 %v245, %v246
    %606 = vadd.xlane.f32.xlu0 %v605
    %v607 = vpop.xlane.xlu0 %606
    %v608 = vadd.f32 %v247, %v248
    %609 = vadd.xlane.f32.xlu0 %v608
    %v610 = vpop.xlane.xlu0 %609
    %v611 = vadd.f32 %v249, %v250
    %612 = vadd.xlane.f32.xlu0 %v611
    %v613 = vpop.xlane.xlu0 %612
    %v614 = vadd.f32 %v251, %v252
    %615 = vadd.xlane.f32.xlu0 %v614
    %v616 = vpop.xlane.xlu0 %615
    %v617 = vadd.f32 %v253, %v254
    %618 = vadd.xlane.f32.xlu0 %v617
    %v619 = vpop.xlane.xlu0 %618
    %v620 = vadd.f32 %v255, %v256
    %621 = vadd.xlane.f32.xlu0 %v620
    %v622 = vpop.xlane.xlu0 %621
    %v623 = vadd.f32 %v257, %v258
    %624 = vadd.xlane.f32.xlu0 %v623
    %v625 = vpop.xlane.xlu0 %624
    %v626 = vadd.f32 %v259, %v260
    %627 = vadd.xlane.f32.xlu0 %v626
    %v628 = vpop.xlane.xlu0 %627
    %v629 = vadd.f32 %v261, %v262
    %630 = vadd.xlane.f32.xlu0 %v629
    %v631 = vpop.xlane.xlu0 %630
    %v632 = vadd.f32 %v263, %v264
    %633 = vadd.xlane.f32.xlu0 %v632
    %v634 = vpop.xlane.xlu0 %633
    %v635 = vadd.f32 %v265, %v266
    %636 = vadd.xlane.f32.xlu0 %v635
    %v637 = vpop.xlane.xlu0 %636
    %v638 = vadd.f32 %v267, %v268
    %639 = vadd.xlane.f32.xlu0 %v638
    %v640 = vpop.xlane.xlu0 %639
    %v641 = vadd.f32 %v269, %v270
    %642 = vadd.xlane.f32.xlu0 %v641
    %v643 = vpop.xlane.xlu0 %642
    %v644 = vadd.f32 %v271, %v272
    %645 = vadd.xlane.f32.xlu0 %v644
    %v646 = vpop.xlane.xlu0 %645
    %v647 = vadd.f32 %v273, %v274
    %648 = vadd.xlane.f32.xlu0 %v647
    %v649 = vpop.xlane.xlu0 %648
    %v650 = vadd.f32 %v275, %v276
    %651 = vadd.xlane.f32.xlu0 %v650
    %v652 = vpop.xlane.xlu0 %651
    %v653 = vadd.f32 %v277, %v278
    %654 = vadd.xlane.f32.xlu0 %v653
    %v655 = vpop.xlane.xlu0 %654
    %v656 = vadd.f32 %v279, %v280
    %657 = vadd.xlane.f32.xlu0 %v656
    %v658 = vpop.xlane.xlu0 %657
    %v659 = vadd.f32 %v281, %v282
    %660 = vadd.xlane.f32.xlu0 %v659
    %v661 = vpop.xlane.xlu0 %660
    %v662 = vadd.f32 %v283, %v284
    %663 = vadd.xlane.f32.xlu0 %v662
    %v664 = vpop.xlane.xlu0 %663
    %v665 = vadd.f32 %v285, %v286
    %666 = vadd.xlane.f32.xlu0 %v665
    %v667 = vpop.xlane.xlu0 %666
    %v668 = vadd.f32 %v287, %v288
    %669 = vadd.xlane.f32.xlu0 %v668
    %v670 = vpop.xlane.xlu0 %669
    %v671 = vadd.f32 %v289, %v290
    %672 = vadd.xlane.f32.xlu0 %v671
    %v673 = vpop.xlane.xlu0 %672
    %v674 = vadd.f32 %v291, %v292
    %675 = vadd.xlane.f32.xlu0 %v674
    %v676 = vpop.xlane.xlu0 %675
    %v677 = vld [vmem:[#allocation2] sm:$0x3]
    %v678 = vld [vmem:[%s1] sm:$0xff]
    %v679 = vld [vmem:[%s1 + $0x8] sm:$0xff]
    %v680 = vld [vmem:[%s1 + $0x10] sm:$0xff]
    %v681 = vld [vmem:[%s1 + $0x18] sm:$0xff]
    %v682 = vld [vmem:[%s1 + $0x20] sm:$0xff]
    %v683 = vld [vmem:[%s1 + $0x28] sm:$0xff]
    %v684 = vld [vmem:[%s1 + $0x30] sm:$0xff]
    %v685 = vld [vmem:[%s1 + $0x38] sm:$0xff]
    %v686 = vld [vmem:[%s1 + $0x40] sm:$0xff]
    %v687 = vld [vmem:[%s1 + $0x48] sm:$0xff]
    %v688 = vld [vmem:[%s1 + $0x50] sm:$0xff]
    %v689 = vld [vmem:[%s1 + $0x58] sm:$0xff]
    %v690 = vld [vmem:[%s1 + $0x60] sm:$0xff]
    %v691 = vld [vmem:[%s1 + $0x68] sm:$0xff]
    %v692 = vld [vmem:[%s1 + $0x70] sm:$0xff]
    %v693 = vld [vmem:[%s1 + $0x78] sm:$0xff]
    %v694 = vld [vmem:[%s1 + $0x80] sm:$0xff]
    %v695 = vld [vmem:[%s1 + $0x88] sm:$0xff]
    %v696 = vld [vmem:[%s1 + $0x90] sm:$0xff]
    %v697 = vld [vmem:[%s1 + $0x98] sm:$0xff]
    %v698 = vld [vmem:[%s1 + $0xa0] sm:$0xff]
    %v699 = vld [vmem:[%s1 + $0xa8] sm:$0xff]
    %v700 = vld [vmem:[%s1 + $0xb0] sm:$0xff]
    %v701 = vld [vmem:[%s1 + $0xb8] sm:$0xff]
    %v702 = vld [vmem:[%s1 + $0xc0] sm:$0xff]
    %v703 = vld [vmem:[%s1 + $0xc8] sm:$0xff]
    %v704 = vld [vmem:[%s1 + $0xd0] sm:$0xff]
    %v705 = vld [vmem:[%s1 + $0xd8] sm:$0xff]
    %v706 = vld [vmem:[%s1 + $0xe0] sm:$0xff]
    %v707 = vld [vmem:[%s1 + $0xe8] sm:$0xff]
    %v708 = vld [vmem:[%s1 + $0xf0] sm:$0xff]
    %v709 = vld [vmem:[%s1 + $0xf8] sm:$0xff]
    %v710 = vld [vmem:[%s1 + $0x100] sm:$0xff]
    %v711 = vld [vmem:[%s1 + $0x108] sm:$0xff]
    %v712 = vld [vmem:[%s1 + $0x110] sm:$0xff]
    %v713 = vld [vmem:[%s1 + $0x118] sm:$0xff]
    %v714 = vld [vmem:[%s1 + $0x120] sm:$0xff]
    %v715 = vld [vmem:[%s1 + $0x128] sm:$0xff]
    %v716 = vld [vmem:[%s1 + $0x130] sm:$0xff]
    %v717 = vld [vmem:[%s1 + $0x138] sm:$0xff]
    %v718 = vld [vmem:[%s1 + $0x140] sm:$0xff]
    %v719 = vld [vmem:[%s1 + $0x148] sm:$0xff]
    %v720 = vld [vmem:[%s1 + $0x150] sm:$0xff]
    %v721 = vld [vmem:[%s1 + $0x158] sm:$0xff]
    %v722 = vld [vmem:[%s1 + $0x160] sm:$0xff]
    %v723 = vld [vmem:[%s1 + $0x168] sm:$0xff]
    %v724 = vld [vmem:[%s1 + $0x170] sm:$0xff]
    %v725 = vld [vmem:[%s1 + $0x178] sm:$0xff]
    %v726 = vld [vmem:[%s1 + $0x180] sm:$0xff]
    %v727 = vld [vmem:[%s1 + $0x188] sm:$0xff]
    %v728 = vld [vmem:[%s1 + $0x190] sm:$0xff]
    %v729 = vld [vmem:[%s1 + $0x198] sm:$0xff]
    %v730 = vld [vmem:[%s1 + $0x1a0] sm:$0xff]
    %v731 = vld [vmem:[%s1 + $0x1a8] sm:$0xff]
    %v732 = vld [vmem:[%s1 + $0x1b0] sm:$0xff]
    %v733 = vld [vmem:[%s1 + $0x1b8] sm:$0xff]
    %v734 = vld [vmem:[%s1 + $0x1c0] sm:$0xff]
    %v735 = vld [vmem:[%s1 + $0x1c8] sm:$0xff]
    %v736 = vld [vmem:[%s1 + $0x1d0] sm:$0xff]
    %v737 = vld [vmem:[%s1 + $0x1d8] sm:$0xff]
    %v738 = vld [vmem:[%s1 + $0x1e0] sm:$0xff]
    %v739 = vld [vmem:[%s1 + $0x1e8] sm:$0xff]
    %v740 = vld [vmem:[%s1 + $0x1f0] sm:$0xff]
    %v741 = vld [vmem:[%s1 + $0x1f8] sm:$0xff]
    %v870 = vlaneseq
    %v871 = vand.u32 %v870, 127
    %v872 = vperm.slane %v295, %v871
    %v873 = vadd.s32 %v871, 4294967288
    %v874 = vperm.slane %v298, %v873
    %vm875 = vcmask 130112
    %v876 = vsel %vm875, %v874, %v872
    %v877 = vadd.s32 %v871, 4294967280
    %v878 = vperm.slane %v301, %v877
    %vm879 = vcmask 195712
    %v880 = vsel %vm879, %v878, %v876
    %v881 = vadd.s32 %v871, 4294967272
    %v882 = vperm.slane %v304, %v881
    %vm883 = vcmask 261312
    %v884 = vsel %vm883, %v882, %v880
    %v885 = vadd.s32 %v871, 4294967264
    %v886 = vperm.slane %v307, %v885
    %vm887 = vcmask 326912
    %v888 = vsel %vm887, %v886, %v884
    %v889 = vadd.s32 %v871, 4294967256
    %v890 = vperm.slane %v310, %v889
    %vm891 = vcmask 392512
    %v892 = vsel %vm891, %v890, %v888
    %v893 = vadd.s32 %v871, 4294967248
    %v894 = vperm.slane %v313, %v893
    %vm895 = vcmask 458112
    %v896 = vsel %vm895, %v894, %v892
    %v897 = vadd.s32 %v871, 4294967240
    %v898 = vperm.slane %v316, %v897
    %vm899 = vcmask 523712
    %v900 = vsel %vm899, %v898, %v896
    %v901 = vadd.s32 %v871, 4294967232
    %v902 = vperm.slane %v319, %v901
    %vm903 = vcmask 589312
    %v904 = vsel %vm903, %v902, %v900
    %v905 = vadd.s32 %v871, 4294967224
    %v906 = vperm.slane %v322, %v905
    %vm907 = vcmask 654912
    %v908 = vsel %vm907, %v906, %v904
    %v909 = vadd.s32 %v871, 4294967216
    %v910 = vperm.slane %v325, %v909
    %vm911 = vcmask 720512
    %v912 = vsel %vm911, %v910, %v908
    %v913 = vadd.s32 %v871, 4294967208
    %v914 = vperm.slane %v328, %v913
    %vm915 = vcmask 786112
    %v916 = vsel %vm915, %v914, %v912
    %v917 = vadd.s32 %v871, 4294967200
    %v918 = vperm.slane %v331, %v917
    %vm919 = vcmask 851712
    %v920 = vsel %vm919, %v918, %v916
    %v921 = vadd.s32 %v871, 4294967192
    %v922 = vperm.slane %v334, %v921
    %vm923 = vcmask 917312
    %v924 = vsel %vm923, %v922, %v920
    %v925 = vadd.s32 %v871, 4294967184
    %v926 = vperm.slane %v337, %v925
    %vm927 = vcmask 982912
    %v928 = vsel %vm927, %v926, %v924
    %v929 = vadd.s32 %v871, 4294967176
    %v930 = vperm.slane %v340, %v929
    %vm931 = vcmask 1048512
    %v932 = vsel %vm931, %v930, %v928
    %v933 = vperm.slane %v343, %v871
    %v934 = vperm.slane %v346, %v873
    %v935 = vsel %vm875, %v934, %v933
    %v936 = vperm.slane %v349, %v877
    %v937 = vsel %vm879, %v936, %v935
    %v938 = vperm.slane %v352, %v881
    %v939 = vsel %vm883, %v938, %v937
    %v940 = vperm.slane %v355, %v885
    %v941 = vsel %vm887, %v940, %v939
    %v942 = vperm.slane %v358, %v889
    %v943 = vsel %vm891, %v942, %v941
    %v944 = vperm.slane %v361, %v893
    %v945 = vsel %vm895, %v944, %v943
    %v946 = vperm.slane %v364, %v897
    %v947 = vsel %vm899, %v946, %v945
    %v948 = vperm.slane %v367, %v901
    %v949 = vsel %vm903, %v948, %v947
    %v950 = vperm.slane %v370, %v905
    %v951 = vsel %vm907, %v950, %v949
    %v952 = vperm.slane %v373, %v909
    %v953 = vsel %vm911, %v952, %v951
    %v954 = vperm.slane %v376, %v913
    %v955 = vsel %vm915, %v954, %v953
    %v956 = vperm.slane %v379, %v917
    %v957 = vsel %vm919, %v956, %v955
    %v958 = vperm.slane %v382, %v921
    %v959 = vsel %vm923, %v958, %v957
    %v960 = vperm.slane %v385, %v925
    %v961 = vsel %vm927, %v960, %v959
    %v962 = vperm.slane %v388, %v929
    %v963 = vsel %vm931, %v962, %v961
    %v964 = vperm.slane %v391, %v871
    %v965 = vperm.slane %v394, %v873
    %v966 = vsel %vm875, %v965, %v964
    %v967 = vperm.slane %v397, %v877
    %v968 = vsel %vm879, %v967, %v966
    %v969 = vperm.slane %v400, %v881
    %v970 = vsel %vm883, %v969, %v968
    %v971 = vperm.slane %v403, %v885
    %v972 = vsel %vm887, %v971, %v970
    %v973 = vperm.slane %v406, %v889
    %v974 = vsel %vm891, %v973, %v972
    %v975 = vperm.slane %v409, %v893
    %v976 = vsel %vm895, %v975, %v974
    %v977 = vperm.slane %v412, %v897
    %v978 = vsel %vm899, %v977, %v976
    %v979 = vperm.slane %v415, %v901
    %v980 = vsel %vm903, %v979, %v978
    %v981 = vperm.slane %v418, %v905
    %v982 = vsel %vm907, %v981, %v980
    %v983 = vperm.slane %v421, %v909
    %v984 = vsel %vm911, %v983, %v982
    %v985 = vperm.slane %v424, %v913
    %v986 = vsel %vm915, %v985, %v984
    %v987 = vperm.slane %v427, %v917
    %v988 = vsel %vm919, %v987, %v986
    %v989 = vperm.slane %v430, %v921
    %v990 = vsel %vm923, %v989, %v988
    %v991 = vperm.slane %v433, %v925
    %v992 = vsel %vm927, %v991, %v990
    %v993 = vperm.slane %v436, %v929
    %v994 = vsel %vm931, %v993, %v992
    %v995 = vperm.slane %v439, %v871
    %v996 = vperm.slane %v442, %v873
    %v997 = vsel %vm875, %v996, %v995
    %v998 = vperm.slane %v445, %v877
    %v999 = vsel %vm879, %v998, %v997
    %v1000 = vperm.slane %v448, %v881
    %v1001 = vsel %vm883, %v1000, %v999
    %v1002 = vperm.slane %v451, %v885
    %v1003 = vsel %vm887, %v1002, %v1001
    %v1004 = vperm.slane %v454, %v889
    %v1005 = vsel %vm891, %v1004, %v1003
    %v1006 = vperm.slane %v457, %v893
    %v1007 = vsel %vm895, %v1006, %v1005
    %v1008 = vperm.slane %v460, %v897
    %v1009 = vsel %vm899, %v1008, %v1007
    %v1010 = vperm.slane %v463, %v901
    %v1011 = vsel %vm903, %v1010, %v1009
    %v1012 = vperm.slane %v466, %v905
    %v1013 = vsel %vm907, %v1012, %v1011
    %v1014 = vperm.slane %v469, %v909
    %v1015 = vsel %vm911, %v1014, %v1013
    %v1016 = vperm.slane %v472, %v913
    %v1017 = vsel %vm915, %v1016, %v1015
    %v1018 = vperm.slane %v475, %v917
    %v1019 = vsel %vm919, %v1018, %v1017
    %v1020 = vperm.slane %v478, %v921
    %v1021 = vsel %vm923, %v1020, %v1019
    %v1022 = vperm.slane %v481, %v925
    %v1023 = vsel %vm927, %v1022, %v1021
    %v1024 = vperm.slane %v484, %v929
    %v1025 = vsel %vm931, %v1024, %v1023
    %v1026 = vperm.slane %v487, %v871
    %v1027 = vperm.slane %v490, %v873
    %v1028 = vsel %vm875, %v1027, %v1026
    %v1029 = vperm.slane %v493, %v877
    %v1030 = vsel %vm879, %v1029, %v1028
    %v1031 = vperm.slane %v496, %v881
    %v1032 = vsel %vm883, %v1031, %v1030
    %v1033 = vperm.slane %v499, %v885
    %v1034 = vsel %vm887, %v1033, %v1032
    %v1035 = vperm.slane %v502, %v889
    %v1036 = vsel %vm891, %v1035, %v1034
    %v1037 = vperm.slane %v505, %v893
    %v1038 = vsel %vm895, %v1037, %v1036
    %v1039 = vperm.slane %v508, %v897
    %v1040 = vsel %vm899, %v1039, %v1038
    %v1041 = vperm.slane %v511, %v901
    %v1042 = vsel %vm903, %v1041, %v1040
    %v1043 = vperm.slane %v514, %v905
    %v1044 = vsel %vm907, %v1043, %v1042
    %v1045 = vperm.slane %v517, %v909
    %v1046 = vsel %vm911, %v1045, %v1044
    %v1047 = vperm.slane %v520, %v913
    %v1048 = vsel %vm915, %v1047, %v1046
    %v1049 = vperm.slane %v523, %v917
    %v1050 = vsel %vm919, %v1049, %v1048
    %v1051 = vperm.slane %v526, %v921
    %v1052 = vsel %vm923, %v1051, %v1050
    %v1053 = vperm.slane %v529, %v925
    %v1054 = vsel %vm927, %v1053, %v1052
    %v1055 = vperm.slane %v532, %v929
    %v1056 = vsel %vm931, %v1055, %v1054
    %v1057 = vperm.slane %v535, %v871
    %v1058 = vperm.slane %v538, %v873
    %v1059 = vsel %vm875, %v1058, %v1057
    %v1060 = vperm.slane %v541, %v877
    %v1061 = vsel %vm879, %v1060, %v1059
    %v1062 = vperm.slane %v544, %v881
    %v1063 = vsel %vm883, %v1062, %v1061
    %v1064 = vperm.slane %v547, %v885
    %v1065 = vsel %vm887, %v1064, %v1063
    %v1066 = vperm.slane %v550, %v889
    %v1067 = vsel %vm891, %v1066, %v1065
    %v1068 = vperm.slane %v553, %v893
    %v1069 = vsel %vm895, %v1068, %v1067
    %v1070 = vperm.slane %v556, %v897
    %v1071 = vsel %vm899, %v1070, %v1069
    %v1072 = vperm.slane %v559, %v901
    %v1073 = vsel %vm903, %v1072, %v1071
    %v1074 = vperm.slane %v562, %v905
    %v1075 = vsel %vm907, %v1074, %v1073
    %v1076 = vperm.slane %v565, %v909
    %v1077 = vsel %vm911, %v1076, %v1075
    %v1078 = vperm.slane %v568, %v913
    %v1079 = vsel %vm915, %v1078, %v1077
    %v1080 = vperm.slane %v571, %v917
    %v1081 = vsel %vm919, %v1080, %v1079
    %v1082 = vperm.slane %v574, %v921
    %v1083 = vsel %vm923, %v1082, %v1081
    %v1084 = vperm.slane %v577, %v925
    %v1085 = vsel %vm927, %v1084, %v1083
    %v1086 = vperm.slane %v580, %v929
    %v1087 = vsel %vm931, %v1086, %v1085
    %v1088 = vperm.slane %v583, %v871
    %v1089 = vperm.slane %v586, %v873
    %v1090 = vsel %vm875, %v1089, %v1088
    %v1091 = vperm.slane %v589, %v877
    %v1092 = vsel %vm879, %v1091, %v1090
    %v1093 = vperm.slane %v592, %v881
    %v1094 = vsel %vm883, %v1093, %v1092
    %v1095 = vperm.slane %v595, %v885
    %v1096 = vsel %vm887, %v1095, %v1094
    %v1097 = vperm.slane %v598, %v889
    %v1098 = vsel %vm891, %v1097, %v1096
    %v1099 = vperm.slane %v601, %v893
    %v1100 = vsel %vm895, %v1099, %v1098
    %v1101 = vperm.slane %v604, %v897
    %v1102 = vsel %vm899, %v1101, %v1100
    %v1103 = vperm.slane %v607, %v901
    %v1104 = vsel %vm903, %v1103, %v1102
    %v1105 = vperm.slane %v610, %v905
    %v1106 = vsel %vm907, %v1105, %v1104
    %v1107 = vperm.slane %v613, %v909
    %v1108 = vsel %vm911, %v1107, %v1106
    %v1109 = vperm.slane %v616, %v913
    %v1110 = vsel %vm915, %v1109, %v1108
    %v1111 = vperm.slane %v619, %v917
    %v1112 = vsel %vm919, %v1111, %v1110
    %v1113 = vperm.slane %v622, %v921
    %v1114 = vsel %vm923, %v1113, %v1112
    %v1115 = vperm.slane %v625, %v925
    %v1116 = vsel %vm927, %v1115, %v1114
    %v1117 = vperm.slane %v628, %v929
    %v1118 = vsel %vm931, %v1117, %v1116
    %v1119 = vperm.slane %v631, %v871
    %v1120 = vperm.slane %v634, %v873
    %v1121 = vsel %vm875, %v1120, %v1119
    %v1122 = vperm.slane %v637, %v877
    %v1123 = vsel %vm879, %v1122, %v1121
    %v1124 = vperm.slane %v640, %v881
    %v1125 = vsel %vm883, %v1124, %v1123
    %v1126 = vperm.slane %v643, %v885
    %v1127 = vsel %vm887, %v1126, %v1125
    %v1128 = vperm.slane %v646, %v889
    %v1129 = vsel %vm891, %v1128, %v1127
    %v1130 = vperm.slane %v649, %v893
    %v1131 = vsel %vm895, %v1130, %v1129
    %v1132 = vperm.slane %v652, %v897
    %v1133 = vsel %vm899, %v1132, %v1131
    %v1134 = vperm.slane %v655, %v901
    %v1135 = vsel %vm903, %v1134, %v1133
    %v1136 = vperm.slane %v658, %v905
    %v1137 = vsel %vm907, %v1136, %v1135
    %v1138 = vperm.slane %v661, %v909
    %v1139 = vsel %vm911, %v1138, %v1137
    %v1140 = vperm.slane %v664, %v913
    %v1141 = vsel %vm915, %v1140, %v1139
    %v1142 = vperm.slane %v667, %v917
    %v1143 = vsel %vm919, %v1142, %v1141
    %v1144 = vperm.slane %v670, %v921
    %v1145 = vsel %vm923, %v1144, %v1143
    %v1146 = vperm.slane %v673, %v925
    %v1147 = vsel %vm927, %v1146, %v1145
    %v1148 = vperm.slane %v676, %v929
    %v1149 = vsel %vm931, %v1148, %v1147
    %vm1150 = vcmask 1041409
    %v1151 = vsel %vm1150, %v1056, %v932
    %v1152 = vsel %vm1150, %v1087, %v963
    %v1153 = vsel %vm1150, %v1118, %v994
    %v1154 = vsel %vm1150, %v1149, %v1025
    %1159 = vmatpush.msra.mxu0 %v693
    %1160 = vmatpush.msra.mxu0 %v692
    %1161 = vmatpush.msra.mxu0 %v691
    %1162 = vmatpush.msra.mxu0 %v690
    %1163 = vmatpush.msra.mxu0 %v689
    %1164 = vmatpush.msra.mxu0 %v688
    %1165 = vmatpush.msra.mxu0 %v687
    %1166 = vmatpush.msra.mxu0 %v686
    %1167 = vmatpush.msra.mxu0 %v685
    %1168 = vmatpush.msra.mxu0 %v684
    %1169 = vmatpush.msra.mxu0 %v683
    %1170 = vmatpush.msra.mxu0 %v682
    %1171 = vmatpush.msra.mxu0 %v681
    %1172 = vmatpush.msra.mxu0 %v680
    %1173 = vmatpush.msra.mxu0 %v679
    %1174 = vmatpush.msra.mxu0 %v678
    %1175 = vmatmul.f32.gmra.mxu0 %v1151
    %v1176 = vpop.f32.mrf.mxu0
    %v1177 = vadd.f32 0.0, %v1176
    %1178 = vdwg.mxu0
    %1179 = vmatpush.msra.mxu0 %v709
    %1180 = vmatpush.msra.mxu0 %v708
    %1181 = vmatpush.msra.mxu0 %v707
    %1182 = vmatpush.msra.mxu0 %v706
    %1183 = vmatpush.msra.mxu0 %v705
    %1184 = vmatpush.msra.mxu0 %v704
    %1185 = vmatpush.msra.mxu0 %v703
    %1186 = vmatpush.msra.mxu0 %v702
    %1187 = vmatpush.msra.mxu0 %v701
    %1188 = vmatpush.msra.mxu0 %v700
    %1189 = vmatpush.msra.mxu0 %v699
    %1190 = vmatpush.msra.mxu0 %v698
    %1191 = vmatpush.msra.mxu0 %v697
    %1192 = vmatpush.msra.mxu0 %v696
    %1193 = vmatpush.msra.mxu0 %v695
    %1194 = vmatpush.msra.mxu0 %v694
    %1195 = vmatmul.f32.gmra.mxu0 %v1152
    %v1196 = vpop.f32.mrf.mxu0
    %v1197 = vadd.f32 %v1177, %v1196
    %1198 = vdwg.mxu0
    %1199 = vmatpush.msra.mxu0 %v725
    %1200 = vmatpush.msra.mxu0 %v724
    %1201 = vmatpush.msra.mxu0 %v723
    %1202 = vmatpush.msra.mxu0 %v722
    %1203 = vmatpush.msra.mxu0 %v721
    %1204 = vmatpush.msra.mxu0 %v720
    %1205 = vmatpush.msra.mxu0 %v719
    %1206 = vmatpush.msra.mxu0 %v718
    %1207 = vmatpush.msra.mxu0 %v717
    %1208 = vmatpush.msra.mxu0 %v716
    %1209 = vmatpush.msra.mxu0 %v715
    %1210 = vmatpush.msra.mxu0 %v714
    %1211 = vmatpush.msra.mxu0 %v713
    %1212 = vmatpush.msra.mxu0 %v712
    %1213 = vmatpush.msra.mxu0 %v711
    %1214 = vmatpush.msra.mxu0 %v710
    %1215 = vmatmul.f32.gmra.mxu0 %v1153
    %v1216 = vpop.f32.mrf.mxu0
    %v1217 = vadd.f32 %v1197, %v1216
    %1218 = vdwg.mxu0
    %1219 = vmatpush.msra.mxu0 %v741
    %1220 = vmatpush.msra.mxu0 %v740
    %1221 = vmatpush.msra.mxu0 %v739
    %1222 = vmatpush.msra.mxu0 %v738
    %1223 = vmatpush.msra.mxu0 %v737
    %1224 = vmatpush.msra.mxu0 %v736
    %1225 = vmatpush.msra.mxu0 %v735
    %1226 = vmatpush.msra.mxu0 %v734
    %1227 = vmatpush.msra.mxu0 %v733
    %1228 = vmatpush.msra.mxu0 %v732
    %1229 = vmatpush.msra.mxu0 %v731
    %1230 = vmatpush.msra.mxu0 %v730
    %1231 = vmatpush.msra.mxu0 %v729
    %1232 = vmatpush.msra.mxu0 %v728
    %1233 = vmatpush.msra.mxu0 %v727
    %1234 = vmatpush.msra.mxu0 %v726
    %1235 = vmatmul.f32.gmra.mxu0 %v1154
    %v1236 = vpop.f32.mrf.mxu0
    %v1237 = vadd.f32 %v1217, %v1236
    %1238 = vdwg.mxu0
    %v1239 = vadd.f32 %v677, %v1237
    %vm1240 = vcmask 17408
    %1241 = vst.msk [vmem:[#allocation2] sm:$0x3] %vm1240, %v1239
    // Predicated region
    $region22: #{tpu_custom_call.1} parent=1 // pred_check
      %p1242 = pneg %p31
    $region23: #{tpu_custom_call.1} parent=1 // pred_check_branch
      %1244 = sbr.rel (%p1242) target = $region25
    $region24: #{tpu_custom_call.1} parent=1 // pred_region
      %v1245 = vld [vmem:[#allocation2] sm:$0x3]
      %v1246 = vld [vmem:[%s2] sm:$0x1]
      %v1248 = vperm.slane %v1246, 0
      %v1250 = vadd.f32 %v1245, %v1248
      %v1252 = vrot.slane %v1250, 1
      %vm1254 = vcmask 16384
      %1255 = vst.msk [vmem:[#allocation6] sm:$0x1] %vm1254, %v1250
      %1256 = vst.msk [vmem:[#allocation6 + $0x1] sm:$0x1] %vm1254, %v1252
    $region25: #{tpu_custom_call.1} parent=1 // pred_fallthru
      _
    // Predicated region
    $region26: #{tpu_custom_call.1} parent=1 // pred_check
      _
    $region27: #{tpu_custom_call.1} parent=1 // pred_check_branch
      %1258 = sbr.rel (0) target = $region29
    $region28: #{tpu_custom_call.1} parent=1 // pred_region
      %1260 = vsyncadd [#allocation5], 0
      %s1261 = sshll.u32 [#allocation6], 4
      %s1262 = int_to_ptr.vmem [resolvable:$true] %s1261
      %s1263 = sshll.u32 %s3, 4
      %s1264 = int_to_ptr.hbm [resolvable:$true] %s1263
      %1269 = dma.vmem_to_hbm [thread:$0]  %s1262, 32, %s1264, [#allocation5], 16, 16, 1
    $region29: #{tpu_custom_call.1} parent=1 // pred_fallthru
      _
    // Predicated region
    $region30: #{tpu_custom_call.1} parent=1 // pred_check
      _
    $region31: #{tpu_custom_call.1} parent=1 // pred_check_branch
      %1271 = sbr.rel (0) target = $region33
    $region32: #{tpu_custom_call.1} parent=1 // pred_region
      %1273 = dma.done [#allocation5], 32
    $region33: #{tpu_custom_call.1} parent=1 // pred_fallthru
      _
    %1274 = vsyncpa [#allocation4], 1
    %1275 = vsyncpa [#allocation5], 1

</llo_original>
